<compile_context>
chip_gen: v5e
topology: v5e:2x2
jax: 0.10.0
libtpu: 0.0.40
codegen_flags: <defaults>
</compile_context>

<pallas_src>
import math

import jax
import jax.numpy as jnp
from jax.experimental import pallas as pl
from jax.experimental.pallas import tpu as pltpu


def qa_output_kernel(start_ref, end_ref, mask_ref, w_ref, b_ref,
                     logp1_ref, logp2_ref):
    """One batch-tile of the QAOutput forward.

    start_ref, end_ref : (TB, S, H) native dtype (e.g. bf16) in VMEM
    mask_ref           : (TB, S)    int8 in VMEM (0 = padded position)
    w_ref              : (1, H)     f32 in VMEM (resident across the grid)
    b_ref              : (1,)       f32 in SMEM (scalar)
    logp1_ref/logp2_ref: (TB, S)    f32 outputs
    """
    w = w_ref[...].astype(jnp.float32)                    # (1, H)
    b = b_ref[0]                                          # scalar from SMEM
    valid = mask_ref[...].astype(jnp.float32) > 0.0       # (TB, S) — hoisted, reused
    neg_large = jnp.float32(-1e30)

    def masked_log_softmax(x_ref):
        # Contract H on the VPU (+ XLU lane reduce). Math is kept in f32:
        # v5e has no bf16 VALU/EUP and f32 keeps tight agreement with the
        # reference; the f32 temporary is accounted for in the VMEM budget.
        x = x_ref[...].astype(jnp.float32)                 # (TB, S, H)
        logits = jnp.sum(x * w[None, :, :], axis=-1) + b   # (TB, S)
        # masked_softmax: m*x + (1-m)*(-1e30)  ==  where(m, x, -1e30) for 0/1 mask
        masked = jnp.where(valid, logits, neg_large)
        mx = jnp.max(masked, axis=-1, keepdims=True)
        lse = jnp.log(jnp.sum(jnp.exp(masked - mx), axis=-1, keepdims=True))
        return masked - mx - lse

    logp1_ref[...] = masked_log_softmax(start_ref)
    # Original PyTorch forward applies startFF to `end` as well (endFF unused).
    logp2_ref[...] = masked_log_softmax(end_ref)


def _round_up(x, m):
    return ((x + m - 1) // m) * m


def _vmem_caps():
    """(per-step block budget, compiler vmem limit) adapted to physical VMEM."""
    try:
        cap = pltpu.get_tpu_info().vmem_capacity_bytes
    except Exception:
        cap = 64 * 1024 * 1024                     # assume the smallest (v7x-like) part
    if cap <= 64 * 1024 * 1024:                    # v7x: 64 MiB per TensorCore
        return 12 * 1024 * 1024, 48 * 1024 * 1024
    return 28 * 1024 * 1024, 96 * 1024 * 1024      # v5e / v6e: 128 MiB physical


def _block_bytes(tb, S, H, in_itemsize):
    """Estimated VMEM footprint of one grid step, including lane/sublane
    padding, double-buffering of every streamed operand, and the in-kernel
    f32 compute temporaries."""
    Hl = _round_up(H, 128)                         # last dim maps to lanes
    Sl = _round_up(S, 128)                         # mask/output last dim -> lanes
    sub_in = 8 * max(1, 4 // in_itemsize)          # sublane packing of input dtype
    in_blk = tb * _round_up(S, sub_in) * Hl * in_itemsize
    mask_blk = _round_up(tb, 32) * Sl * 1          # int8
    out_blk = _round_up(tb, 8) * Sl * 4            # f32
    pipelined = 2 * (2 * in_blk + mask_blk + 2 * out_blk)   # x2 double-buffering
    scratch = 2 * tb * _round_up(S, 8) * Hl * 4    # f32 temporaries of the contraction
    weight = 8 * Hl * 4                            # resident (1, H) f32 tile
    return pipelined + scratch + weight


def _choose_block_b(B, S, H, in_itemsize, budget):
    """Largest batch tile whose full footprint fits `budget`. Multiple of 8
    (sublane-aligned (TB, S) mask/output blocks) unless it covers all of B."""
    if _block_bytes(B, S, H, in_itemsize) <= budget:
        tb = B
    else:
        tb = 8
        while tb + 8 <= B and _block_bytes(tb + 8, S, H, in_itemsize) <= budget:
            tb += 8
    # Keep >= 2 grid steps when the batch is big enough so the "parallel" batch
    # axis can shard across both TensorCores on v7x (no-op on v5e/v6e, and the
    # blocks stay large enough to amortize the ~0.35 us per-step overhead).
    if B >= 16:
        tb = min(tb, _round_up(pl.cdiv(B, 2), 8))
    return max(1, min(tb, B))


def qa_output(start, end, mask, w_start, b_start, *, block_b=None):
    """start/end: (B, S, H) float; mask: (B, S) of {0,1}; returns two (B, S)
    float32 log-probability tensors (log_p_start, log_p_end)."""
    B, S, H = start.shape
    assert end.shape == (B, S, H) and mask.shape == (B, S)

    # Stream start/end in their native dtype straight from HBM (no wrapper pad
    # or upcast); widen to f32 inside the kernel. Mask goes in as int8.
    mask_i8 = mask.astype(jnp.int8)
    w2 = w_start.reshape(1, H).astype(jnp.float32)
    b2 = b_start.reshape(1).astype(jnp.float32)

    in_itemsize = jnp.dtype(start.dtype).itemsize
    budget, vmem_limit = _vmem_caps()
    tb = min(block_b, B) if block_b is not None else _choose_block_b(
        B, S, H, in_itemsize, budget)
    grid = (pl.cdiv(B, tb),)

    in_specs = [
        pl.BlockSpec((tb, S, H), lambda i: (i, 0, 0)),          # start
        pl.BlockSpec((tb, S, H), lambda i: (i, 0, 0)),          # end
        pl.BlockSpec((tb, S), lambda i: (i, 0)),                # mask (int8)
        pl.BlockSpec((1, H), lambda i: (0, 0)),                 # weight (resident)
        pl.BlockSpec(memory_space=pltpu.MemorySpace.SMEM),      # bias scalar
    ]
    out_specs = (
        pl.BlockSpec((tb, S), lambda i: (i, 0)),
        pl.BlockSpec((tb, S), lambda i: (i, 0)),
    )
    out_shape = (
        jax.ShapeDtypeStruct((B, S), jnp.float32),
        jax.ShapeDtypeStruct((B, S), jnp.float32),
    )

    # Advisory cost: the kernel is HBM-bandwidth-bound (~1 FLOP/byte).
    bytes_accessed = (2 * B * S * H * in_itemsize   # start + end
                      + B * S * 1                   # int8 mask
                      + 2 * B * S * 4               # f32 outputs
                      + H * 4 + 4)                  # weight + bias
    cost = pl.CostEstimate(
        flops=4 * B * S * H,                        # mul+add over H for both inputs
        transcendentals=2 * B * S,                  # exp (log is negligible)
        bytes_accessed=bytes_accessed,
    )

    fn = pl.pallas_call(
        qa_output_kernel,
        out_shape=out_shape,
        grid_spec=pltpu.PrefetchScalarGridSpec(
            num_scalar_prefetch=0,
            grid=grid,
            in_specs=in_specs,
            out_specs=out_specs,
        ),
        compiler_params=pltpu.CompilerParams(
            dimension_semantics=("parallel",),      # batch tiles are independent
            vmem_limit_bytes=vmem_limit,
        ),
        cost_estimate=cost,
    )
    return fn(start, end, mask_i8, w2, b2)


def reference(start, end, mask, w_start, b_start):
    """Pure-JAX f32 reference for correctness checking."""
    def one(x):
        logits = jnp.einsum("bsh,h->bs", x, w_start) + b_start[0]
        masked = mask * logits + (1.0 - mask) * (-1e30)
        return jax.nn.log_softmax(masked, axis=-1)
    return one(start), one(end)


if __name__ == "__main__":
    B, S, H = 2, 8, 32
    key = jax.random.PRNGKey(0)
    k_start, k_end, k_w1, k_w2 = jax.random.split(key, 4)

    # bf16 activations: streamed into the kernel without an f32 upcast.
    start = jax.random.normal(k_start, (B, S, H), dtype=jnp.float32).astype(jnp.bfloat16)
    end = jax.random.normal(k_end, (B, S, H), dtype=jnp.float32).astype(jnp.bfloat16)

    # mask: batch 0 has full length S, batch 1 has length 5 (rest padded).
    lengths = jnp.array([S, 5], dtype=jnp.int32)
    mask = (jnp.arange(S)[None, :] < lengths[:, None]).astype(jnp.float32)

    # startFF = InitializedLayer(H, 1, bias=True): xavier_uniform_ weight, bias 0.
    bound = math.sqrt(6.0 / (H + 1))
    w_start = jax.random.uniform(k_w1, (H,), jnp.float32, -bound, bound)
    b_start = jnp.zeros((1,), dtype=jnp.float32)
    # endFF is constructed in the original __init__ but never used in forward.
    w_end = jax.random.uniform(k_w2, (H,), jnp.float32, -bound, bound)  # unused
    b_end = jnp.zeros((1,), dtype=jnp.float32)                          # unused

    log_p1, log_p2 = qa_output(start, end, mask, w_start, b_start)
    jax.block_until_ready((log_p1, log_p2))

    ref_p1, ref_p2 = reference(start.astype(jnp.float32), end.astype(jnp.float32),
                               mask, w_start, b_start)
    assert log_p1.shape == (B, S) and log_p2.shape == (B, S)
    assert jnp.allclose(log_p1, ref_p1, atol=2e-4, rtol=2e-4), \
        float(jnp.max(jnp.abs(log_p1 - ref_p1)))
    assert jnp.allclose(log_p2, ref_p2, atol=2e-4, rtol=2e-4), \
        float(jnp.max(jnp.abs(log_p2 - ref_p2)))

    print("KERNEL_OK")
</pallas_src>

<mosaic_0001>
module attributes {stable_mosaic.version = 11 : i64} {
  func.func @qa_output_kernel(%arg0: i32, %arg1: memref<2x8x32xbf16, #tpu.memory_space<vmem>>, %arg2: memref<2x8x32xbf16, #tpu.memory_space<vmem>>, %arg3: memref<2x8xi8, #tpu.memory_space<vmem>>, %arg4: memref<1x32xf32, #tpu.memory_space<vmem>>, %arg5: memref<1xf32, #tpu.memory_space<smem>>, %arg6: memref<2x8xf32, #tpu.memory_space<vmem>>, %arg7: memref<2x8xf32, #tpu.memory_space<vmem>>) attributes {dimension_semantics = [#tpu.dimension_semantics<parallel>], iteration_bounds = array<i64: 1>, scalar_prefetch = 0 : i64, scratch_operands = 0 : i64, tpu.core_type = #tpu.core_type<tc>, window_params = [{transform_indices = @transform_0, window_bounds = array<i64: 2, 8, 32>}, {transform_indices = @transform_1, window_bounds = array<i64: 2, 8, 32>}, {transform_indices = @transform_2, window_bounds = array<i64: 2, 8>}, {pipeline_mode = #tpu.pipeline_mode<synchronous>, transform_indices = @transform_3, window_bounds = array<i64: 1, 32>}, {transform_indices = @transform_4, window_bounds = array<i64: 1>}, {transform_indices = @transform_5, window_bounds = array<i64: 2, 8>}, {transform_indices = @transform_6, window_bounds = array<i64: 2, 8>}]} {
    %c0 = arith.constant 0 : index
    %c0_0 = arith.constant 0 : index
    %0 = vector.load %arg4[%c0, %c0_0] : memref<1x32xf32, #tpu.memory_space<vmem>>, vector<1x32xf32>
    %c0_1 = arith.constant 0 : index
    %1 = memref.load %arg5[%c0_1] : memref<1xf32, #tpu.memory_space<smem>>
    %c0_2 = arith.constant 0 : index
    %c0_3 = arith.constant 0 : index
    %2 = vector.load %arg3[%c0_2, %c0_3] : memref<2x8xi8, #tpu.memory_space<vmem>>, vector<2x8xi8>
    %3 = arith.sitofp %2 : vector<2x8xi8> to vector<2x8xf32>
    %cst = arith.constant 0.000000e+00 : f32
    %4 = vector.broadcast %cst : f32 to vector<2x8xf32>
    %5 = arith.cmpf ogt, %3, %4 : vector<2x8xf32>
    %c0_4 = arith.constant 0 : index
    %c0_5 = arith.constant 0 : index
    %c0_6 = arith.constant 0 : index
    %6 = vector.load %arg1[%c0_4, %c0_5, %c0_6] : memref<2x8x32xbf16, #tpu.memory_space<vmem>>, vector<2x8x32xbf16>
    %7 = arith.extf %6 : vector<2x8x32xbf16> to vector<2x8x32xf32>
    %8 = vector.shape_cast %0 : vector<1x32xf32> to vector<1x1x32xf32>
    %9 = vector.broadcast %8 : vector<1x1x32xf32> to vector<2x8x32xf32>
    %10 = arith.mulf %7, %9 : vector<2x8x32xf32>
    %cst_7 = arith.constant dense<0.000000e+00> : vector<2x8xf32>
    %11 = vector.multi_reduction <add>, %10, %cst_7 [2] : vector<2x8x32xf32> to vector<2x8xf32>
    %12 = vector.broadcast %1 : f32 to vector<2x8xf32>
    %13 = arith.addf %11, %12 : vector<2x8xf32>
    %cst_8 = arith.constant -1.000000e+30 : f32
    %14 = vector.broadcast %cst_8 : f32 to vector<2x8xf32>
    %15 = arith.select %5, %13, %14 : vector<2x8xi1>, vector<2x8xf32>
    %cst_9 = arith.constant dense<0xFF800000> : vector<2xf32>
    %16 = vector.multi_reduction <maximumf>, %15, %cst_9 [1] : vector<2x8xf32> to vector<2xf32>
    %17 = vector.shape_cast %16 : vector<2xf32> to vector<2x1xf32>
    %18 = vector.broadcast %17 : vector<2x1xf32> to vector<2x8xf32>
    %19 = arith.subf %15, %18 : vector<2x8xf32>
    %20 = math.exp %19 : vector<2x8xf32>
    %cst_10 = arith.constant dense<0.000000e+00> : vector<2xf32>
    %21 = vector.multi_reduction <add>, %20, %cst_10 [1] : vector<2x8xf32> to vector<2xf32>
    %22 = vector.shape_cast %21 : vector<2xf32> to vector<2x1xf32>
    %23 = math.log %22 : vector<2x1xf32>
    %24 = vector.broadcast %17 : vector<2x1xf32> to vector<2x8xf32>
    %25 = arith.subf %15, %24 : vector<2x8xf32>
    %26 = vector.broadcast %23 : vector<2x1xf32> to vector<2x8xf32>
    %27 = arith.subf %25, %26 : vector<2x8xf32>
    %c0_11 = arith.constant 0 : index
    %c0_12 = arith.constant 0 : index
    %28 = vector.load %arg6[%c0_11, %c0_12] : memref<2x8xf32, #tpu.memory_space<vmem>>, vector<2x8xf32>
    tpu.vector_store %arg6[%c0_11, %c0_12], %27 {strides = array<i32>} : memref<2x8xf32, #tpu.memory_space<vmem>>, vector<2x8xf32>,
    %c0_13 = arith.constant 0 : index
    %c0_14 = arith.constant 0 : index
    %c0_15 = arith.constant 0 : index
    %29 = vector.load %arg2[%c0_13, %c0_14, %c0_15] : memref<2x8x32xbf16, #tpu.memory_space<vmem>>, vector<2x8x32xbf16>
    %30 = arith.extf %29 : vector<2x8x32xbf16> to vector<2x8x32xf32>
    %31 = vector.shape_cast %0 : vector<1x32xf32> to vector<1x1x32xf32>
    %32 = vector.broadcast %31 : vector<1x1x32xf32> to vector<2x8x32xf32>
    %33 = arith.mulf %30, %32 : vector<2x8x32xf32>
    %cst_16 = arith.constant dense<0.000000e+00> : vector<2x8xf32>
    %34 = vector.multi_reduction <add>, %33, %cst_16 [2] : vector<2x8x32xf32> to vector<2x8xf32>
    %35 = vector.broadcast %1 : f32 to vector<2x8xf32>
    %36 = arith.addf %34, %35 : vector<2x8xf32>
    %cst_17 = arith.constant -1.000000e+30 : f32
    %37 = vector.broadcast %cst_17 : f32 to vector<2x8xf32>
    %38 = arith.select %5, %36, %37 : vector<2x8xi1>, vector<2x8xf32>
    %cst_18 = arith.constant dense<0xFF800000> : vector<2xf32>
    %39 = vector.multi_reduction <maximumf>, %38, %cst_18 [1] : vector<2x8xf32> to vector<2xf32>
    %40 = vector.shape_cast %39 : vector<2xf32> to vector<2x1xf32>
    %41 = vector.broadcast %40 : vector<2x1xf32> to vector<2x8xf32>
    %42 = arith.subf %38, %41 : vector<2x8xf32>
    %43 = math.exp %42 : vector<2x8xf32>
    %cst_19 = arith.constant dense<0.000000e+00> : vector<2xf32>
    %44 = vector.multi_reduction <add>, %43, %cst_19 [1] : vector<2x8xf32> to vector<2xf32>
    %45 = vector.shape_cast %44 : vector<2xf32> to vector<2x1xf32>
    %46 = math.log %45 : vector<2x1xf32>
    %47 = vector.broadcast %40 : vector<2x1xf32> to vector<2x8xf32>
    %48 = arith.subf %38, %47 : vector<2x8xf32>
    %49 = vector.broadcast %46 : vector<2x1xf32> to vector<2x8xf32>
    %50 = arith.subf %48, %49 : vector<2x8xf32>
    %c0_20 = arith.constant 0 : index
    %c0_21 = arith.constant 0 : index
    %51 = vector.load %arg7[%c0_20, %c0_21] : memref<2x8xf32, #tpu.memory_space<vmem>>, vector<2x8xf32>
    tpu.vector_store %arg7[%c0_20, %c0_21], %50 {strides = array<i32>} : memref<2x8xf32, #tpu.memory_space<vmem>>, vector<2x8xf32>,
    return
  }
  func.func @transform_0(%arg0: i32) -> (i32, i32, i32) {
    %c0_i32 = arith.constant 0 : i32
    %c0_i32_0 = arith.constant 0 : i32
    %c0_i32_1 = arith.constant 0 : i32
    return %arg0, %c0_i32, %c0_i32_0 : i32, i32, i32
  }
  func.func @transform_1(%arg0: i32) -> (i32, i32, i32) {
    %c0_i32 = arith.constant 0 : i32
    %c0_i32_0 = arith.constant 0 : i32
    %c0_i32_1 = arith.constant 0 : i32
    return %arg0, %c0_i32, %c0_i32_0 : i32, i32, i32
  }
  func.func @transform_2(%arg0: i32) -> (i32, i32) {
    %c0_i32 = arith.constant 0 : i32
    %c0_i32_0 = arith.constant 0 : i32
    return %arg0, %c0_i32 : i32, i32
  }
  func.func @transform_3(%arg0: i32) -> (i32, i32) {
    %c0_i32 = arith.constant 0 : i32
    %c0_i32_0 = arith.constant 0 : i32
    %c0_i32_1 = arith.constant 0 : i32
    return %c0_i32, %c0_i32_0 : i32, i32
  }
  func.func @transform_4(%arg0: i32) -> i32 {
    %c0_i32 = arith.constant 0 : i32
    %c0_i32_0 = arith.constant 0 : i32
    return %c0_i32 : i32
  }
  func.func @transform_5(%arg0: i32) -> (i32, i32) {
    %c0_i32 = arith.constant 0 : i32
    %c0_i32_0 = arith.constant 0 : i32
    return %arg0, %c0_i32 : i32, i32
  }
  func.func @transform_6(%arg0: i32) -> (i32, i32) {
    %c0_i32 = arith.constant 0 : i32
    %c0_i32_0 = arith.constant 0 : i32
    return %arg0, %c0_i32 : i32, i32
  }
}

</mosaic_0001>

<llo_original>
// kernel: tpu_custom_call.1
$region0: #{tpu_custom_call.1}
  #allocation0 [shape = 'u32[]', space=smem, size = 0x4, offset = 0x4, fixed_abs, tag = 'smem constant byte address 0x4 - core index']
  #allocation1 [shape = 'u32[72,128]{1,0:T(1,128)}', space=vmem, size = 0x9000, scoped, tag = 'internal scratch']
  #allocation2 [shape = 'f32[1]{0:T(128)S(6)}', space=smem, size = 0x200, scoped, tag = 'scoped memory for tpu_custom_call.1']
  %s0 = inlined_call_operand.hbm [shape: bf16[2,8,32], index: 0, kind: input, shape index: {}]
  %s1 = inlined_call_operand.hbm [shape: bf16[2,8,32], index: 1, kind: input, shape index: {}]
  %s2 = inlined_call_operand.vmem [shape: s8[2,8], index: 2, kind: input, shape index: {}]
  %s3 = inlined_call_operand.vmem [shape: f32[1,32], index: 3, kind: input, shape index: {}]
  %s4 = inlined_call_operand.<no memory space> [shape: f32[1], index: 4, kind: input, shape index: {}]
  %s5 = inlined_call_operand.hbm [shape: f32[2,8], index: 5, kind: output, shape index: {0}]
  %s6 = inlined_call_operand.hbm [shape: f32[2,8], index: 6, kind: output, shape index: {1}]
  %7 = xla_tuple %s5, %s6
  %s8 = sld [smem:[#allocation0]]
  $region46: #{tpu_custom_call.1} parent=0
    _
  %s10 = ssub.s32 1, %s8
  %s11 = scalar_select 0, %s10, %s8
  %12 = sst [smem:[#allocation2]] %s4
  $region1: #{tpu_custom_call.1} parent=0
    #allocation3 [shape = 'u8[4096]{0}', space=vmem, size = 0x1000, scoped, tag = 'input window, operand 0, single buffered']
    #allocation4 [shape = 's32[1]{0}', space=sflag, size = 0x4, scoped, tag = 'scoped memory for tpu_custom_call.1']
    #allocation5 [shape = 's32[1]{0}', space=sflag, size = 0x4, scoped, tag = 'scoped memory for tpu_custom_call.1']
    #allocation6 [shape = 'u8[4096]{0}', space=vmem, size = 0x1000, scoped, tag = 'input window, operand 1, single buffered']
    #allocation7 [shape = 's32[1]{0}', space=sflag, size = 0x4, scoped, tag = 'scoped memory for tpu_custom_call.1']
    #allocation8 [shape = 'u8[1024]{0}', space=vmem, size = 0x400, scoped, tag = 'output window, operand 0, single buffered']
    #allocation9 [shape = 'u8[1024]{0}', space=vmem, size = 0x400, scoped, tag = 'output window, operand 1, single buffered']
    #allocation10 [shape = 's32[1]{0}', space=sflag, size = 0x4, scoped, tag = 'scoped memory for tpu_custom_call.1']
    %13 = vsyncpa [#allocation4], 0
    %14 = vsyncpa [#allocation7], 0
    %15 = vsyncpa [#allocation5], 0
    %16 = vsyncpa [#allocation10], 0
    // Predicated region
    $region2: #{tpu_custom_call.1} parent=1 // pred_check
      _
    $region3: #{tpu_custom_call.1} parent=1 // pred_check_branch
      %18 = sbr.rel (0) target = $region5
    $region4: #{tpu_custom_call.1} parent=1 // pred_region
      %20 = vsyncadd [#allocation4], 0
      %s21 = sshll.u32 %s0, 4
      %s22 = int_to_ptr.hbm [resolvable:$true] %s21
      %s23 = sshll.u32 [#allocation3], 4
      %s24 = int_to_ptr.vmem [resolvable:$true] %s23
      %29 = dma.hbm_to_vmem [thread:$0]  %s22, 128, %s24, [#allocation4], 64, 64, 4
    $region5: #{tpu_custom_call.1} parent=1 // pred_fallthru
      _
    // Predicated region
    $region6: #{tpu_custom_call.1} parent=1 // pred_check
      _
    $region7: #{tpu_custom_call.1} parent=1 // pred_check_branch
      %31 = sbr.rel (0) target = $region9
    $region8: #{tpu_custom_call.1} parent=1 // pred_region
      %33 = vsyncadd [#allocation7], 0
      %s34 = sshll.u32 %s1, 4
      %s35 = int_to_ptr.hbm [resolvable:$true] %s34
      %s36 = sshll.u32 [#allocation6], 4
      %s37 = int_to_ptr.vmem [resolvable:$true] %s36
      %42 = dma.hbm_to_vmem [thread:$0]  %s35, 128, %s37, [#allocation7], 64, 64, 4
    $region9: #{tpu_custom_call.1} parent=1 // pred_fallthru
      _
    // Predicated region
    $region10: #{tpu_custom_call.1} parent=1 // pred_check
      _
    $region11: #{tpu_custom_call.1} parent=1 // pred_check_branch
      %44 = sbr.rel (0) target = $region13
    $region12: #{tpu_custom_call.1} parent=1 // pred_region
      _
    $region13: #{tpu_custom_call.1} parent=1 // pred_fallthru
      _
    // Predicated region
    $region14: #{tpu_custom_call.1} parent=1 // pred_check
      _
    $region15: #{tpu_custom_call.1} parent=1 // pred_check_branch
      %46 = sbr.rel (0) target = $region17
    $region16: #{tpu_custom_call.1} parent=1 // pred_region
      _
    $region17: #{tpu_custom_call.1} parent=1 // pred_fallthru
      _
    // Predicated region
    $region18: #{tpu_custom_call.1} parent=1 // pred_check
      _
    $region19: #{tpu_custom_call.1} parent=1 // pred_check_branch
      %48 = sbr.rel (0) target = $region21
    $region20: #{tpu_custom_call.1} parent=1 // pred_region
      _
    $region21: #{tpu_custom_call.1} parent=1 // pred_fallthru
      _
    // Predicated region
    $region22: #{tpu_custom_call.1} parent=1 // pred_check
      _
    $region23: #{tpu_custom_call.1} parent=1 // pred_check_branch
      %50 = sbr.rel (0) target = $region25
    $region24: #{tpu_custom_call.1} parent=1 // pred_region
      %52 = dma.done [#allocation4], 128
    $region25: #{tpu_custom_call.1} parent=1 // pred_fallthru
      _
    // Predicated region
    $region26: #{tpu_custom_call.1} parent=1 // pred_check
      _
    $region27: #{tpu_custom_call.1} parent=1 // pred_check_branch
      %54 = sbr.rel (0) target = $region29
    $region28: #{tpu_custom_call.1} parent=1 // pred_region
      %56 = dma.done [#allocation7], 128
    $region29: #{tpu_custom_call.1} parent=1 // pred_fallthru
      _
    %v57 = vld [vmem:[%s3] sm:$0x1]
    %s58 = sld [smem:[#allocation2]]
    %v59 = vld [vmem:[%s2] sm:$0x1]
    %v60 = vunpack.c.0.s8 %v59
    %v61 = vcvt.s32.f32 %v60
    %vm62 = vcmp.gt.f32.partialorder %v61, 0.0
    %v63 = vld [vmem:[#allocation3] sm:$0xf]
    %v64 = vld [vmem:[#allocation3 + $0x4] sm:$0xf]
    %v65 = vunpack.c.l.bf16 %v63
    %v66 = vunpack.c.l.bf16 %v64
    %v68 = vperm.slane %v57, 0
    %v70 = vmul.f32 %v65, %v68
    %v71 = vmul.f32 %v66, %v68
    %vm72 = vcmask 261120
    %v73 = vsel %vm72, %v70, 0.0
    %74 = vadd.xlane.f32.xlu0 %v73
    %v75 = vpop.xlane.xlu0 %74
    %v76 = vsel %vm72, %v71, 0.0
    %77 = vadd.xlane.f32.xlu0 %v76
    %v78 = vpop.xlane.xlu0 %77
    %v79 = vstv %s58
    %v80 = vadd.f32 %v75, %v79
    %v81 = vadd.f32 %v78, %v79
    %v85 = vunpack.c.l.s4 839922192
    %v86 = vunpack.c.0.s8 %v85
    %v87 = vperm.slane %v80, %v86
    %v89 = vunpack.c.l.s4 1985246804
    %v90 = vunpack.c.0.s8 %v89
    %v91 = vperm.slane %v80, %v90
    %v93 = vunpack.c.l.s4 839922192
    %v94 = vunpack.c.0.s8 %v93
    %v95 = vperm.slane %v81, %v94
    %v97 = vunpack.c.l.s4 1985246804
    %v98 = vunpack.c.0.s8 %v97
    %v99 = vperm.slane %v81, %v98
    %100 = vst [vmem:[#allocation1] ss:$2 sm:$0xff] %v87
    %s101 = scalar_lea.vmem [#allocation1], 1
    %102 = vst [vmem:[%s101] ss:$2 sm:$0xff] %v91
    %v103 = vld.sshfl [vmem:[#allocation1] sm:$0xff pattern:$0x75316420]
    %s104 = scalar_lea.vmem [#allocation1], 16
    %105 = vst [vmem:[%s104] ss:$2 sm:$0xff] %v95
    %s106 = scalar_lea.vmem [#allocation1], 17
    %107 = vst [vmem:[%s106] ss:$2 sm:$0xff] %v99
    %v108 = vld.sshfl [vmem:[#allocation1 + $0x10] sm:$0xff pattern:$0x75316420]
    %109 = vset.pattern.permute.xlu0 0
    %110 = vperm.xlu0 %109, %v103
    %v111 = vpop.permute.xlu0 %110
    %112 = vset.pattern.permute.xlu0 0
    %113 = vperm.xlu0 %112, %v108
    %v114 = vpop.permute.xlu0 %113
    %v115 = vlaneseq
    %v116 = vand.u32 %v115, 127
    %v117 = vperm.slane %v111, %v116
    %v118 = vperm.slane %v114, %v116
    %vm119 = vcmask 1041409
    %v120 = vsel %vm119, %v118, %v117
    %v122 = vsel %vm62, %v120, -1e+30
    %vm123 = vcmask 58368
    %v124 = vsel %vm123, %v122, -inf
    %125 = vmax.xlane.f32.xlu0 %v124
    %v126 = vpop.xlane.xlu0 %125
    %v127 = vsub.f32 %v122, %v126
    %v128 = vmul.f32 %v127, 1.442695
    %v129 = vpow.pop %v128
    %v130 = vsel %vm123, %v129, 0.0
    %131 = vadd.xlane.f32.xlu0 %v130
    %v132 = vpop.xlane.xlu0 %131
    %v133 = vlog2.pop %v132
    %v134 = vmul.f32 %v133, 0.6931472
    %v135 = vsub.f32 %v127, %v134
    %136 = vst.msk [vmem:[#allocation8] sm:$0x3] %vm123, %v135
    %v137 = vld [vmem:[#allocation6] sm:$0xf]
    %v138 = vld [vmem:[#allocation6 + $0x4] sm:$0xf]
    %v139 = vunpack.c.l.bf16 %v137
    %v140 = vunpack.c.l.bf16 %v138
    %v141 = vmul.f32 %v139, %v68
    %v142 = vmul.f32 %v140, %v68
    %v143 = vsel %vm72, %v141, 0.0
    %144 = vadd.xlane.f32.xlu0 %v143
    %v145 = vpop.xlane.xlu0 %144
    %v146 = vsel %vm72, %v142, 0.0
    %147 = vadd.xlane.f32.xlu0 %v146
    %v148 = vpop.xlane.xlu0 %147
    %v149 = vadd.f32 %v145, %v79
    %v150 = vadd.f32 %v148, %v79
    %v154 = vunpack.c.l.s4 839922192
    %v155 = vunpack.c.0.s8 %v154
    %v156 = vperm.slane %v149, %v155
    %v158 = vunpack.c.l.s4 1985246804
    %v159 = vunpack.c.0.s8 %v158
    %v160 = vperm.slane %v149, %v159
    %v162 = vunpack.c.l.s4 839922192
    %v163 = vunpack.c.0.s8 %v162
    %v164 = vperm.slane %v150, %v163
    %v166 = vunpack.c.l.s4 1985246804
    %v167 = vunpack.c.0.s8 %v166
    %v168 = vperm.slane %v150, %v167
    %169 = vst [vmem:[#allocation1] ss:$2 sm:$0xff] %v156
    %s170 = scalar_lea.vmem [#allocation1], 1
    %171 = vst [vmem:[%s170] ss:$2 sm:$0xff] %v160
    %v172 = vld.sshfl [vmem:[#allocation1] sm:$0xff pattern:$0x75316420]
    %s173 = scalar_lea.vmem [#allocation1], 16
    %174 = vst [vmem:[%s173] ss:$2 sm:$0xff] %v164
    %s175 = scalar_lea.vmem [#allocation1], 17
    %176 = vst [vmem:[%s175] ss:$2 sm:$0xff] %v168
    %v177 = vld.sshfl [vmem:[#allocation1 + $0x10] sm:$0xff pattern:$0x75316420]
    %178 = vset.pattern.permute.xlu0 0
    %179 = vperm.xlu0 %178, %v172
    %v180 = vpop.permute.xlu0 %179
    %181 = vset.pattern.permute.xlu0 0
    %182 = vperm.xlu0 %181, %v177
    %v183 = vpop.permute.xlu0 %182
    %v184 = vperm.slane %v180, %v116
    %v185 = vperm.slane %v183, %v116
    %v186 = vsel %vm119, %v185, %v184
    %v188 = vsel %vm62, %v186, -1e+30
    %v189 = vsel %vm123, %v188, -inf
    %190 = vmax.xlane.f32.xlu0 %v189
    %v191 = vpop.xlane.xlu0 %190
    %v192 = vsub.f32 %v188, %v191
    %v193 = vmul.f32 %v192, 1.442695
    %v194 = vpow.pop %v193
    %v195 = vsel %vm123, %v194, 0.0
    %196 = vadd.xlane.f32.xlu0 %v195
    %v197 = vpop.xlane.xlu0 %196
    %v198 = vlog2.pop %v197
    %v199 = vmul.f32 %v198, 0.6931472
    %v200 = vsub.f32 %v192, %v199
    %201 = vst.msk [vmem:[#allocation9] sm:$0x3] %vm123, %v200
    // Predicated region
    $region30: #{tpu_custom_call.1} parent=1 // pred_check
      _
    $region31: #{tpu_custom_call.1} parent=1 // pred_check_branch
      %203 = sbr.rel (0) target = $region33
    $region32: #{tpu_custom_call.1} parent=1 // pred_region
      %205 = vsyncadd [#allocation5], 0
      %s207 = sshll.u32 [#allocation8], 4
      %s208 = int_to_ptr.vmem [resolvable:$true] %s207
      %s209 = sshll.u32 %s5, 4
      %s210 = int_to_ptr.hbm [resolvable:$true] %s209
      %212 = dma.vmem_to_hbm [thread:$0]  %s208, 32, %s210, [#allocation5]
    $region33: #{tpu_custom_call.1} parent=1 // pred_fallthru
      _
    // Predicated region
    $region34: #{tpu_custom_call.1} parent=1 // pred_check
      _
    $region35: #{tpu_custom_call.1} parent=1 // pred_check_branch
      %214 = sbr.rel (0) target = $region37
    $region36: #{tpu_custom_call.1} parent=1 // pred_region
      %216 = vsyncadd [#allocation10], 0
      %s218 = sshll.u32 [#allocation9], 4
      %s219 = int_to_ptr.vmem [resolvable:$true] %s218
      %s220 = sshll.u32 %s6, 4
      %s221 = int_to_ptr.hbm [resolvable:$true] %s220
      %223 = dma.vmem_to_hbm [thread:$0]  %s219, 32, %s221, [#allocation10]
    $region37: #{tpu_custom_call.1} parent=1 // pred_fallthru
      _
    // Predicated region
    $region38: #{tpu_custom_call.1} parent=1 // pred_check
      _
    $region39: #{tpu_custom_call.1} parent=1 // pred_check_branch
      %225 = sbr.rel (0) target = $region41
    $region40: #{tpu_custom_call.1} parent=1 // pred_region
      %227 = dma.done [#allocation5], 32
    $region41: #{tpu_custom_call.1} parent=1 // pred_fallthru
      _
    // Predicated region
    $region42: #{tpu_custom_call.1} parent=1 // pred_check
      _
    $region43: #{tpu_custom_call.1} parent=1 // pred_check_branch
      %229 = sbr.rel (0) target = $region45
    $region44: #{tpu_custom_call.1} parent=1 // pred_region
      %231 = dma.done [#allocation10], 32
    $region45: #{tpu_custom_call.1} parent=1 // pred_fallthru
      _
    %232 = vsyncpa [#allocation4], 1
    %233 = vsyncpa [#allocation7], 1
    %234 = vsyncpa [#allocation5], 1
    %235 = vsyncpa [#allocation10], 1

</llo_original>
